<compile_context>
chip_gen: v7x
topology: tpu7x:2x2x1
jax: 0.10.0
libtpu: 0.0.40
codegen_flags: <defaults>
</compile_context>

<pallas_src>
import math
import numpy as np
import jax
import jax.numpy as jnp
from jax.experimental import pallas as pl
from jax.experimental.pallas import tpu as pltpu


def _attention_kernel(q_ref, k_ref, v_ref,      # VMEM (Nq,Dq) (Nk,Dk) (Nk,Dq) f32
                      wg_ref, bg_ref,           # (Dq, Dk) bf16, (1, Dk) f32
                      wv_ref, bv_ref,           # (Dq, V)  bf16, (1, V)  f32
                      out_ref):                 # (Nq, V) f32
    f32, bf16 = jnp.float32, jnp.bfloat16

    # Fused query-side projection (key projection + 1/sqrt(A) folded at build).
    t = jnp.dot(q_ref[...].astype(bf16), wg_ref[...],
                preferred_element_type=f32) + bg_ref[...]             # (Nq, Dk)

    # Attention logits: contract the feature axes directly (no k.T relayout).
    # Equals (query . key_j)/sqrt(A) up to a per-row constant (softmax-invariant).
    g = jax.lax.dot_general(t.astype(bf16), k_ref[...].astype(bf16),
                            (((1,), (1,)), ((), ())),
                            preferred_element_type=f32)               # (Nq, Nk)

    # Value projection.
    value = jnp.dot(v_ref[...].astype(bf16), wv_ref[...],
                    preferred_element_type=f32) + bv_ref[...]         # (Nk, V)

    # Softmax over keys in f32 (exp + approx reciprocal live on the EUP slot).
    # min(., 0) is exact on logical elements (m is the row max) and keeps any
    # physical lane padding finite ahead of the masked contraction below.
    m = jnp.max(g, axis=-1, keepdims=True)
    p = jnp.exp(jnp.minimum(g - m, 0.0))
    score = p * pl.reciprocal(jnp.sum(p, axis=-1, keepdims=True), approx=True)

    # output = score @ value  ( == sum(score[..., None] * value, dim=-2) )
    out_ref[...] = jnp.dot(score.astype(bf16), value.astype(bf16),
                           preferred_element_type=f32)


def single_head_attention(q, k, v, params):
    """q:(Nq,Dq), k:(Nk,Dk), v:(Nk,Dq) float32; params from build_params()."""
    wg, bg, wv, bv = params
    nq = q.shape[0]
    vdim = wv.shape[1]
    vmem = pl.BlockSpec(memory_space=pltpu.MemorySpace.VMEM)
    return pl.pallas_call(
        _attention_kernel,
        out_shape=jax.ShapeDtypeStruct((nq, vdim), jnp.float32),
        in_specs=[vmem] * 7,
        out_specs=vmem,
    )(q, k, v, wg, bg, wv, bv)


def build_params(raw_params, attention_size):
    """raw_params: ((wq,bq),(wk,bk),(wv,bv)) in torch layout  w:(out,in), b:(out,).
    One-time fold of the key projection + 1/sqrt(A) into the query projection,
    plus bf16 pre-cast of the MXU weight operands."""
    (wq, bq), (wk, bk), (wv, bv) = raw_params
    del bk  # row-constant under the softmax -> drops out exactly
    HIGH = jax.lax.Precision.HIGHEST
    scale = 1.0 / math.sqrt(attention_size)
    wg = jnp.dot(wq.T, wk, precision=HIGH) * scale          # (Dq, Dk)
    bg = jnp.dot(bq[None, :], wk, precision=HIGH) * scale   # (1, Dk)
    return (wg.astype(jnp.bfloat16),
            bg.astype(jnp.float32),
            wv.T.astype(jnp.bfloat16),                      # (Dq, V)
            bv[None, :].astype(jnp.float32))                # (1, V)


# ----------------------------- pure-JAX reference -----------------------------
def reference_forward(q, k, v, raw_params, attention_size):
    (wq, bq), (wk, bk), (wv, bv) = raw_params
    HIGH = jax.lax.Precision.HIGHEST
    query = jnp.dot(q, wq.T, precision=HIGH) + bq
    key = jnp.dot(k, wk.T, precision=HIGH) + bk
    value = jnp.dot(v, wv.T, precision=HIGH) + bv
    g = jnp.dot(query, key.T, precision=HIGH) / math.sqrt(attention_size)
    score = jax.nn.softmax(g, axis=-1)
    return jnp.sum(score[..., None] * value, axis=-2)


if __name__ == "__main__":
    QUERY_SIZE = KEY_SIZE = VALUE_SIZE = ATTN_SIZE = 32
    NQ, NK = 9, 13     # deliberately not multiples of 8 -> exercises the unpadded path

    key = jax.random.PRNGKey(0)
    kq, kk, kv_, kp = jax.random.split(key, 4)
    q = jax.random.normal(kq, (NQ, QUERY_SIZE), jnp.float32)
    k = jax.random.normal(kk, (NK, KEY_SIZE), jnp.float32)
    v = jax.random.normal(kv_, (NK, QUERY_SIZE), jnp.float32)  # dense_v in_features = query_size

    pw = jax.random.split(kp, 6)

    def torch_linear_params(kw, kb, fan_in, fan_out):
        bound = 1.0 / math.sqrt(fan_in)
        w = jax.random.uniform(kw, (fan_out, fan_in), jnp.float32, -bound, bound)
        b = jax.random.uniform(kb, (fan_out,), jnp.float32, -bound, bound)
        return w, b

    raw = (torch_linear_params(pw[0], pw[1], QUERY_SIZE, ATTN_SIZE),
           torch_linear_params(pw[2], pw[3], KEY_SIZE, ATTN_SIZE),
           torch_linear_params(pw[4], pw[5], QUERY_SIZE, VALUE_SIZE))
    params = build_params(raw, ATTN_SIZE)

    out = jax.jit(single_head_attention)(q, k, v, params)
    out = jax.block_until_ready(out)

    ref = reference_forward(q, k, v, raw, ATTN_SIZE)
    # Single-pass bf16-input / f32-accum MXU + EUP approx reciprocal vs f32 HIGHEST reference.
    np.testing.assert_allclose(np.asarray(out), np.asarray(ref), rtol=2e-2, atol=2e-2)
    print("KERNEL_OK")
</pallas_src>

<mosaic_0001>
module attributes {stable_mosaic.version = 11 : i64} {
  func.func @_attention_kernel(%arg0: memref<9x32xf32, #tpu.memory_space<vmem>>, %arg1: memref<13x32xf32, #tpu.memory_space<vmem>>, %arg2: memref<13x32xf32, #tpu.memory_space<vmem>>, %arg3: memref<32x32xbf16, #tpu.memory_space<vmem>>, %arg4: memref<1x32xf32, #tpu.memory_space<vmem>>, %arg5: memref<32x32xbf16, #tpu.memory_space<vmem>>, %arg6: memref<1x32xf32, #tpu.memory_space<vmem>>, %arg7: memref<9x32xf32, #tpu.memory_space<vmem>>) attributes {dimension_semantics = [], scalar_prefetch = 0 : i64, scratch_operands = 0 : i64, tpu.core_type = #tpu.core_type<tc>} {
    %c0 = arith.constant 0 : index
    %c0_0 = arith.constant 0 : index
    %0 = vector.load %arg0[%c0, %c0_0] : memref<9x32xf32, #tpu.memory_space<vmem>>, vector<9x32xf32>
    %1 = arith.truncf %0 : vector<9x32xf32> to vector<9x32xbf16>
    %c0_1 = arith.constant 0 : index
    %c0_2 = arith.constant 0 : index
    %2 = vector.load %arg3[%c0_1, %c0_2] : memref<32x32xbf16, #tpu.memory_space<vmem>>, vector<32x32xbf16>
    %cst = arith.constant dense<0.000000e+00> : vector<9x32xf32>
    %3 = tpu.matmul %1, %2, %cst {dimension_numbers = #tpu.dot_dimension_numbers<[1], [0], [0], [1], [0, 0, 1, 1], [], []>} : vector<9x32xbf16>, vector<32x32xbf16>, vector<9x32xf32> -> vector<9x32xf32>
    %c0_3 = arith.constant 0 : index
    %c0_4 = arith.constant 0 : index
    %4 = vector.load %arg4[%c0_3, %c0_4] : memref<1x32xf32, #tpu.memory_space<vmem>>, vector<1x32xf32>
    %5 = vector.broadcast %4 : vector<1x32xf32> to vector<9x32xf32>
    %6 = arith.addf %3, %5 : vector<9x32xf32>
    %7 = arith.truncf %6 : vector<9x32xf32> to vector<9x32xbf16>
    %c0_5 = arith.constant 0 : index
    %c0_6 = arith.constant 0 : index
    %8 = vector.load %arg1[%c0_5, %c0_6] : memref<13x32xf32, #tpu.memory_space<vmem>>, vector<13x32xf32>
    %9 = arith.truncf %8 : vector<13x32xf32> to vector<13x32xbf16>
    %cst_7 = arith.constant dense<0.000000e+00> : vector<9x13xf32>
    %10 = tpu.matmul %7, %9, %cst_7 {dimension_numbers = #tpu.dot_dimension_numbers<[1], [1], [0], [0], [0, 0, 1, 0], [], []>} : vector<9x32xbf16>, vector<13x32xbf16>, vector<9x13xf32> -> vector<9x13xf32>
    %c0_8 = arith.constant 0 : index
    %c0_9 = arith.constant 0 : index
    %11 = vector.load %arg2[%c0_8, %c0_9] : memref<13x32xf32, #tpu.memory_space<vmem>>, vector<13x32xf32>
    %12 = arith.truncf %11 : vector<13x32xf32> to vector<13x32xbf16>
    %c0_10 = arith.constant 0 : index
    %c0_11 = arith.constant 0 : index
    %13 = vector.load %arg5[%c0_10, %c0_11] : memref<32x32xbf16, #tpu.memory_space<vmem>>, vector<32x32xbf16>
    %cst_12 = arith.constant dense<0.000000e+00> : vector<13x32xf32>
    %14 = tpu.matmul %12, %13, %cst_12 {dimension_numbers = #tpu.dot_dimension_numbers<[1], [0], [0], [1], [0, 0, 1, 1], [], []>} : vector<13x32xbf16>, vector<32x32xbf16>, vector<13x32xf32> -> vector<13x32xf32>
    %c0_13 = arith.constant 0 : index
    %c0_14 = arith.constant 0 : index
    %15 = vector.load %arg6[%c0_13, %c0_14] : memref<1x32xf32, #tpu.memory_space<vmem>>, vector<1x32xf32>
    %16 = vector.broadcast %15 : vector<1x32xf32> to vector<13x32xf32>
    %17 = arith.addf %14, %16 : vector<13x32xf32>
    %cst_15 = arith.constant dense<0xFF800000> : vector<9xf32>
    %18 = vector.multi_reduction <maximumf>, %10, %cst_15 [1] : vector<9x13xf32> to vector<9xf32>
    %19 = vector.shape_cast %18 : vector<9xf32> to vector<9x1xf32>
    %20 = vector.broadcast %19 : vector<9x1xf32> to vector<9x13xf32>
    %21 = arith.subf %10, %20 : vector<9x13xf32>
    %cst_16 = arith.constant 0.000000e+00 : f32
    %22 = vector.broadcast %cst_16 : f32 to vector<9x13xf32>
    %23 = arith.minimumf %21, %22 : vector<9x13xf32>
    %24 = math.exp %23 : vector<9x13xf32>
    %cst_17 = arith.constant dense<0.000000e+00> : vector<9xf32>
    %25 = vector.multi_reduction <add>, %24, %cst_17 [1] : vector<9x13xf32> to vector<9xf32>
    %26 = vector.shape_cast %25 : vector<9xf32> to vector<9x1xf32>
    %27 = tpu.reciprocal %26 {approx = true} : vector<9x1xf32> -> vector<9x1xf32>
    %28 = vector.broadcast %27 : vector<9x1xf32> to vector<9x13xf32>
    %29 = arith.mulf %24, %28 : vector<9x13xf32>
    %30 = arith.truncf %29 : vector<9x13xf32> to vector<9x13xbf16>
    %31 = arith.truncf %17 : vector<13x32xf32> to vector<13x32xbf16>
    %cst_18 = arith.constant dense<0.000000e+00> : vector<9x32xf32>
    %32 = tpu.matmul %30, %31, %cst_18 {dimension_numbers = #tpu.dot_dimension_numbers<[1], [0], [0], [1], [0, 0, 1, 1], [], []>} : vector<9x13xbf16>, vector<13x32xbf16>, vector<9x32xf32> -> vector<9x32xf32>
    %c0_19 = arith.constant 0 : index
    %c0_20 = arith.constant 0 : index
    %33 = vector.load %arg7[%c0_19, %c0_20] : memref<9x32xf32, #tpu.memory_space<vmem>>, vector<9x32xf32>
    tpu.vector_store %arg7[%c0_19, %c0_20], %32 {strides = array<i32>} : memref<9x32xf32, #tpu.memory_space<vmem>>, vector<9x32xf32>,
    return
  }
}

</mosaic_0001>

<llo_original>
// kernel: single_head_attention.1
$region0: #{single_head_attention.1}
  #allocation0 [shape = 'u32[]', space=smem, size = 0x4, offset = 0x4, fixed_abs, tag = 'smem constant byte address 0x4 - core index']
  #allocation1 [shape = 'u32[144,128]{1,0:T(1,128)}', space=vmem, size = 0x12000, scoped, tag = 'internal scratch']
  %s0 = inlined_call_operand.hbm [shape: f32[9,32], index: 0, kind: input, shape index: {}]
  %s1 = inlined_call_operand.hbm [shape: f32[13,32], index: 1, kind: input, shape index: {}]
  %s2 = inlined_call_operand.hbm [shape: f32[13,32], index: 2, kind: input, shape index: {}]
  %s3 = inlined_call_operand.hbm [shape: bf16[32,32], index: 3, kind: input, shape index: {}]
  %s4 = inlined_call_operand.vmem [shape: f32[1,32], index: 4, kind: input, shape index: {}]
  %s5 = inlined_call_operand.vmem [shape: bf16[32,32], index: 5, kind: input, shape index: {}]
  %s6 = inlined_call_operand.vmem [shape: f32[1,32], index: 6, kind: input, shape index: {}]
  %s7 = inlined_call_operand.hbm [shape: f32[9,32], index: 7, kind: output, shape index: {}]
  %s8 = sld [smem:[#allocation0]]
  $region54: #{single_head_attention.1} parent=0
    _
  %s10 = ssub.s32 1, %s8
  %s11 = scalar_select 0, %s10, %s8
  $region1: #{single_head_attention.1} parent=0
    #allocation2 [shape = 'u8[8192]{0}', space=vmem, size = 0x2000, scoped, tag = 'input window, operand 0, single buffered']
    #allocation3 [shape = 's32[1]{0}', space=sflag, size = 0x4, scoped, tag = 'scoped memory for single_head_attention.1']
    #allocation4 [shape = 's32[1]{0}', space=sflag, size = 0x4, scoped, tag = 'scoped memory for single_head_attention.1']
    #allocation5 [shape = 'u8[8192]{0}', space=vmem, size = 0x2000, scoped, tag = 'input window, operand 1, single buffered']
    #allocation6 [shape = 's32[1]{0}', space=sflag, size = 0x4, scoped, tag = 'scoped memory for single_head_attention.1']
    #allocation7 [shape = 'u8[8192]{0}', space=vmem, size = 0x2000, scoped, tag = 'input window, operand 2, single buffered']
    #allocation8 [shape = 'u8[8192]{0}', space=vmem, size = 0x2000, scoped, tag = 'input window, operand 3, single buffered']
    #allocation9 [shape = 's32[1]{0}', space=sflag, size = 0x4, scoped, tag = 'scoped memory for single_head_attention.1']
    #allocation10 [shape = 'u8[8192]{0}', space=vmem, size = 0x2000, scoped, tag = 'output window, operand 0, single buffered']
    %12 = vsyncpa [#allocation3], 0
    %13 = vsyncpa [#allocation6], 0
    %14 = vsyncpa [#allocation9], 0
    %15 = vsyncpa [#allocation4], 0
    // Predicated region
    $region2: #{single_head_attention.1} parent=1 // pred_check
      _
    $region3: #{single_head_attention.1} parent=1 // pred_check_branch
      %17 = sbr.rel (0) target = $region5
    $region4: #{single_head_attention.1} parent=1 // pred_region
      %s19 = ssub.s32 256, 256
      %20 = vsyncadd [#allocation3], %s19
      %s21 = sshll.u32 [#allocation2], 4
      %s22 = int_to_ptr.vmem [resolvable:$true] %s21
      %27 = dma.hbm_to_vmem [thread:$0]  %s0, 256, %s22, [#allocation3], 128, 128, 8
    $region5: #{single_head_attention.1} parent=1 // pred_fallthru
      _
    // Predicated region
    $region6: #{single_head_attention.1} parent=1 // pred_check
      _
    $region7: #{single_head_attention.1} parent=1 // pred_check_branch
      %29 = sbr.rel (0) target = $region9
    $region8: #{single_head_attention.1} parent=1 // pred_region
      %s31 = ssub.s32 256, 256
      %32 = vsyncadd [#allocation6], %s31
      %s33 = sshll.u32 [#allocation5], 4
      %s34 = int_to_ptr.vmem [resolvable:$true] %s33
      %39 = dma.hbm_to_vmem [thread:$0]  %s1, 256, %s34, [#allocation6], 128, 128, 8
    $region9: #{single_head_attention.1} parent=1 // pred_fallthru
      _
    // Predicated region
    $region10: #{single_head_attention.1} parent=1 // pred_check
      _
    $region11: #{single_head_attention.1} parent=1 // pred_check_branch
      %41 = sbr.rel (0) target = $region13
    $region12: #{single_head_attention.1} parent=1 // pred_region
      %s43 = ssub.s32 256, 256
      %44 = vsyncadd [#allocation6], %s43
      %s45 = sshll.u32 [#allocation7], 4
      %s46 = int_to_ptr.vmem [resolvable:$true] %s45
      %51 = dma.hbm_to_vmem [thread:$0]  %s2, 256, %s46, [#allocation6], 128, 128, 8
    $region13: #{single_head_attention.1} parent=1 // pred_fallthru
      _
    // Predicated region
    $region14: #{single_head_attention.1} parent=1 // pred_check
      _
    $region15: #{single_head_attention.1} parent=1 // pred_check_branch
      %53 = sbr.rel (0) target = $region17
    $region16: #{single_head_attention.1} parent=1 // pred_region
      %s55 = ssub.s32 256, 256
      %56 = vsyncadd [#allocation9], %s55
      %s57 = sshll.u32 [#allocation8], 4
      %s58 = int_to_ptr.vmem [resolvable:$true] %s57
      %63 = dma.hbm_to_vmem [thread:$0]  %s3, 256, %s58, [#allocation9], 64, 64, 4
    $region17: #{single_head_attention.1} parent=1 // pred_fallthru
      _
    // Predicated region
    $region18: #{single_head_attention.1} parent=1 // pred_check
      _
    $region19: #{single_head_attention.1} parent=1 // pred_check_branch
      %65 = sbr.rel (0) target = $region21
    $region20: #{single_head_attention.1} parent=1 // pred_region
      _
    $region21: #{single_head_attention.1} parent=1 // pred_fallthru
      _
    // Predicated region
    $region22: #{single_head_attention.1} parent=1 // pred_check
      _
    $region23: #{single_head_attention.1} parent=1 // pred_check_branch
      %67 = sbr.rel (0) target = $region25
    $region24: #{single_head_attention.1} parent=1 // pred_region
      _
    $region25: #{single_head_attention.1} parent=1 // pred_fallthru
      _
    // Predicated region
    $region26: #{single_head_attention.1} parent=1 // pred_check
      _
    $region27: #{single_head_attention.1} parent=1 // pred_check_branch
      %69 = sbr.rel (0) target = $region29
    $region28: #{single_head_attention.1} parent=1 // pred_region
      _
    $region29: #{single_head_attention.1} parent=1 // pred_fallthru
      _
    // Predicated region
    $region30: #{single_head_attention.1} parent=1 // pred_check
      _
    $region31: #{single_head_attention.1} parent=1 // pred_check_branch
      %71 = sbr.rel (0) target = $region33
    $region32: #{single_head_attention.1} parent=1 // pred_region
      %72 = dma.done [#allocation3], 256
    $region33: #{single_head_attention.1} parent=1 // pred_fallthru
      _
    // Predicated region
    $region34: #{single_head_attention.1} parent=1 // pred_check
      _
    $region35: #{single_head_attention.1} parent=1 // pred_check_branch
      %74 = sbr.rel (0) target = $region37
    $region36: #{single_head_attention.1} parent=1 // pred_region
      %75 = dma.done [#allocation6], 256
    $region37: #{single_head_attention.1} parent=1 // pred_fallthru
      _
    // Predicated region
    $region38: #{single_head_attention.1} parent=1 // pred_check
      _
    $region39: #{single_head_attention.1} parent=1 // pred_check_branch
      %77 = sbr.rel (0) target = $region41
    $region40: #{single_head_attention.1} parent=1 // pred_region
      %78 = dma.done [#allocation6], 256
    $region41: #{single_head_attention.1} parent=1 // pred_fallthru
      _
    // Predicated region
    $region42: #{single_head_attention.1} parent=1 // pred_check
      _
    $region43: #{single_head_attention.1} parent=1 // pred_check_branch
      %80 = sbr.rel (0) target = $region45
    $region44: #{single_head_attention.1} parent=1 // pred_region
      %81 = dma.done [#allocation9], 256
    $region45: #{single_head_attention.1} parent=1 // pred_fallthru
      _
    %v83 = vld [vmem:[#allocation2] sm:$0xff]
    %v84 = vld [vmem:[#allocation2 + $0x8] sm:$0x1]
    %v85 = vpack.c.bf16 %v84, %v83
    %v86 = vld [vmem:[#allocation8] sm:$0xf]
    %v87 = vld [vmem:[#allocation8 + $0x4] sm:$0xf]
    %v88 = vld [vmem:[#allocation8 + $0x8] sm:$0xf]
    %v89 = vld [vmem:[#allocation8 + $0xc] sm:$0xf]
    %v90 = vld [vmem:[%s4] sm:$0x1]
    %v92 = vlaneseq
    %v93 = vshrl.u32 %v92, 7
    %v94 = vsub.s32 0, %v93
    %v95 = vrot.slane %v90, %v94
    %v101 = vunpack.c.l.b16 %v86
    %v102 = vunpack.c.l.b16 %v87
    %v103 = vunpack.c.l.b16 %v88
    %v104 = vunpack.c.l.b16 %v89
    %v105 = vpack.c.b16 %v102, %v101
    %v106 = vpack.c.b16 %v104, %v103
    %vm109 = vcmask 261120
    %v111 = vsel %vm109, %v85, 0
    %113 = vmatprep.subr.bf16.mxu0 0
    %114 = vmatpush1.bf16.msra.mxu0 %v105
    %115 = vmatprep.subr.bf16.mxu0 0
    %116 = vmatpush1.bf16.msra.mxu0 %v106
    %117 = vmatprep.subr.bf16.mxu0 0
    %118 = vmatpush1.bf16.msra.mxu0 0
    %119 = vmatprep.subr.bf16.mxu0 0
    %120 = vmatpush1.bf16.msra.mxu0 0
    %121 = vmatprep.subr.bf16.mxu0 0
    %122 = vmatpush1.bf16.msra.mxu0 0
    %123 = vmatprep.subr.bf16.mxu0 0
    %124 = vmatpush1.bf16.msra.mxu0 0
    %125 = vmatprep.subr.bf16.mxu0 0
    %126 = vmatpush1.bf16.msra.mxu0 0
    %127 = vmatprep.subr.bf16.mxu0 0
    %128 = vmatpush1.bf16.msra.mxu0 0
    %129 = vmatprep.subr.bf16.mxu0 0
    %130 = vmatpush1.bf16.msra.mxu0 0
    %131 = vmatprep.subr.bf16.mxu0 0
    %132 = vmatpush1.bf16.msra.mxu0 0
    %133 = vmatprep.subr.bf16.mxu0 0
    %134 = vmatpush1.bf16.msra.mxu0 0
    %135 = vmatprep.subr.bf16.mxu0 0
    %136 = vmatpush1.bf16.msra.mxu0 0
    %137 = vmatprep.subr.bf16.mxu0 0
    %138 = vmatpush1.bf16.msra.mxu0 0
    %139 = vmatprep.subr.bf16.mxu0 0
    %140 = vmatpush1.bf16.msra.mxu0 0
    %141 = vmatprep.subr.bf16.mxu0 0
    %142 = vmatpush1.bf16.msra.mxu0 0
    %143 = vmatprep.subr.bf16.mxu0 0
    %144 = vmatpush1.bf16.msra.mxu0 0
    %145 = vmatprep.mubr.bf16.mxu0 0
    %146 = vmatmul.mubr.bf16.gmra.mrb[0].mxu0 %v111
    %v147 = vpop.f32.mrb[0].mxu0
    %v148 = vadd.f32 %v95, %v147
    %v149 = vpop.f32.mrb[0].mxu0
    %v150 = vpop.f32.mrb[0].mxu0
    %v151 = vadd.f32 %v95, %v150
    %v152 = vpop.f32.mrb[0].mxu0
    %153 = vdwg.mxu0
    %v154 = vpack.c.bf16 %v151, %v148
    %v155 = vld [vmem:[#allocation5] sm:$0xff]
    %v156 = vld [vmem:[#allocation5 + $0x8] sm:$0x1f]
    %v157 = vpack.c.bf16 %v156, %v155
    %v159 = vsel %vm109, %v154, 0
    %v162 = vsel %vm109, %v157, 0
    %164 = vmatprep.subr.bf16.mxu0 0
    %165 = vmatpush1.bf16.xpose.msra.mxu0 %v162
    %166 = vmatprep.subr.bf16.mxu0 0
    %167 = vmatpush1.bf16.xpose.msra.mxu0 0
    %168 = vmatprep.subr.bf16.mxu0 0
    %169 = vmatpush1.bf16.xpose.msra.mxu0 0
    %170 = vmatprep.subr.bf16.mxu0 0
    %171 = vmatpush1.bf16.xpose.msra.mxu0 0
    %172 = vmatprep.subr.bf16.mxu0 0
    %173 = vmatpush1.bf16.xpose.msra.mxu0 0
    %174 = vmatprep.subr.bf16.mxu0 0
    %175 = vmatpush1.bf16.xpose.msra.mxu0 0
    %176 = vmatprep.subr.bf16.mxu0 0
    %177 = vmatpush1.bf16.xpose.msra.mxu0 0
    %178 = vmatprep.subr.bf16.mxu0 0
    %179 = vmatpush1.bf16.xpose.msra.mxu0 0
    %180 = vmatprep.subr.bf16.mxu0 0
    %181 = vmatpush1.bf16.xpose.msra.mxu0 0
    %182 = vmatprep.subr.bf16.mxu0 0
    %183 = vmatpush1.bf16.xpose.msra.mxu0 0
    %184 = vmatprep.subr.bf16.mxu0 0
    %185 = vmatpush1.bf16.xpose.msra.mxu0 0
    %186 = vmatprep.subr.bf16.mxu0 0
    %187 = vmatpush1.bf16.xpose.msra.mxu0 0
    %188 = vmatprep.subr.bf16.mxu0 0
    %189 = vmatpush1.bf16.xpose.msra.mxu0 0
    %190 = vmatprep.subr.bf16.mxu0 0
    %191 = vmatpush1.bf16.xpose.msra.mxu0 0
    %192 = vmatprep.subr.bf16.mxu0 0
    %193 = vmatpush1.bf16.xpose.msra.mxu0 0
    %194 = vmatprep.subr.bf16.mxu0 0
    %195 = vmatpush1.bf16.xpose.msra.mxu0 0
    %196 = vmatprep.mubr.bf16.mxu0 0
    %197 = vmatmul.mubr.bf16.gmra.mrb[0].mxu0 %v159
    %v198 = vpop.f32.mrb[0].mxu0
    %v199 = vadd.f32 0.0, %v198
    %v200 = vpop.f32.mrb[0].mxu0
    %v201 = vpop.f32.mrb[0].mxu0
    %v202 = vadd.f32 0.0, %v201
    %v203 = vpop.f32.mrb[0].mxu0
    %204 = vdwg.mxu0
    %v205 = vld [vmem:[#allocation7] sm:$0xff]
    %v206 = vld [vmem:[#allocation7 + $0x8] sm:$0x1f]
    %v207 = vpack.c.bf16 %v206, %v205
    %v208 = vld [vmem:[%s5] sm:$0xf]
    %v209 = vld [vmem:[%s5 + $0x4] sm:$0xf]
    %v210 = vld [vmem:[%s5 + $0x8] sm:$0xf]
    %v211 = vld [vmem:[%s5 + $0xc] sm:$0xf]
    %v212 = vld [vmem:[%s6] sm:$0x1]
    %v214 = vlaneseq
    %v215 = vshrl.u32 %v214, 7
    %v216 = vsub.s32 0, %v215
    %v217 = vrot.slane %v212, %v216
    %v223 = vunpack.c.l.b16 %v208
    %v224 = vunpack.c.l.b16 %v209
    %v225 = vunpack.c.l.b16 %v210
    %v226 = vunpack.c.l.b16 %v211
    %v227 = vpack.c.b16 %v224, %v223
    %v228 = vpack.c.b16 %v226, %v225
    %v232 = vsel %vm109, %v207, 0
    %234 = vmatprep.subr.bf16.mxu0 0
    %235 = vmatpush1.bf16.msra.mxu0 %v227
    %236 = vmatprep.subr.bf16.mxu0 0
    %237 = vmatpush1.bf16.msra.mxu0 %v228
    %238 = vmatprep.subr.bf16.mxu0 0
    %239 = vmatpush1.bf16.msra.mxu0 0
    %240 = vmatprep.subr.bf16.mxu0 0
    %241 = vmatpush1.bf16.msra.mxu0 0
    %242 = vmatprep.subr.bf16.mxu0 0
    %243 = vmatpush1.bf16.msra.mxu0 0
    %244 = vmatprep.subr.bf16.mxu0 0
    %245 = vmatpush1.bf16.msra.mxu0 0
    %246 = vmatprep.subr.bf16.mxu0 0
    %247 = vmatpush1.bf16.msra.mxu0 0
    %248 = vmatprep.subr.bf16.mxu0 0
    %249 = vmatpush1.bf16.msra.mxu0 0
    %250 = vmatprep.subr.bf16.mxu0 0
    %251 = vmatpush1.bf16.msra.mxu0 0
    %252 = vmatprep.subr.bf16.mxu0 0
    %253 = vmatpush1.bf16.msra.mxu0 0
    %254 = vmatprep.subr.bf16.mxu0 0
    %255 = vmatpush1.bf16.msra.mxu0 0
    %256 = vmatprep.subr.bf16.mxu0 0
    %257 = vmatpush1.bf16.msra.mxu0 0
    %258 = vmatprep.subr.bf16.mxu0 0
    %259 = vmatpush1.bf16.msra.mxu0 0
    %260 = vmatprep.subr.bf16.mxu0 0
    %261 = vmatpush1.bf16.msra.mxu0 0
    %262 = vmatprep.subr.bf16.mxu0 0
    %263 = vmatpush1.bf16.msra.mxu0 0
    %264 = vmatprep.subr.bf16.mxu0 0
    %265 = vmatpush1.bf16.msra.mxu0 0
    %266 = vmatprep.mubr.bf16.mxu0 0
    %267 = vmatmul.mubr.bf16.gmra.mrb[0].mxu0 %v232
    %v268 = vpop.f32.mrb[0].mxu0
    %v269 = vadd.f32 %v217, %v268
    %v270 = vpop.f32.mrb[0].mxu0
    %v271 = vpop.f32.mrb[0].mxu0
    %v272 = vadd.f32 %v217, %v271
    %v273 = vpop.f32.mrb[0].mxu0
    %274 = vdwg.mxu0
    %vm275 = vcmask 105472
    %v276 = vsel %vm275, %v199, -inf
    %277 = vmax.xlane.f32.xlu0 %v276
    %v278 = vpop.xlane.xlu0 %277
    %vm279 = vcmask 98304
    %v280 = vsel %vm279, %v202, -inf
    %281 = vmax.xlane.f32.xlu0 %v280
    %v282 = vpop.xlane.xlu0 %281
    %v283 = vsub.f32 %v199, %v278
    %v284 = vsub.f32 %v202, %v282
    %v285 = vmin.f32 %v283, 0.0
    %v286 = vmin.f32 %v284, 0.0
    %v287 = vmul.f32 %v285, 1.442695
    %v288 = vpow.pop %v287
    %v289 = vmul.f32 %v286, 1.442695
    %v290 = vpow.pop %v289
    %v291 = vsel %vm275, %v288, 0.0
    %292 = vadd.xlane.f32.xlu0 %v291
    %v293 = vpop.xlane.xlu0 %292
    %v294 = vsel %vm279, %v290, 0.0
    %295 = vadd.xlane.f32.xlu0 %v294
    %v296 = vpop.xlane.xlu0 %295
    %v297 = vrcp.pop %v293
    %v298 = vrcp.pop %v296
    %v299 = vmul.f32 %v288, %v297
    %v300 = vmul.f32 %v290, %v298
    %v301 = vpack.c.bf16 %v300, %v299
    %v302 = vpack.c.bf16 %v272, %v269
    %v304 = vsel %vm275, %v301, 0
    %vm306 = vcmask 1045504
    %vm307 = vcmask 1046528
    %v308 = vsel %vm306, 4294967295, 65535
    %v309 = vsel %vm307, %v308, 0
    %v311 = vand.u32 %v302, %v309
    %313 = vmatprep.subr.bf16.mxu0 0
    %314 = vmatpush1.bf16.msra.mxu0 %v311
    %315 = vmatprep.subr.bf16.mxu0 0
    %316 = vmatpush1.bf16.msra.mxu0 0
    %317 = vmatprep.subr.bf16.mxu0 0
    %318 = vmatpush1.bf16.msra.mxu0 0
    %319 = vmatprep.subr.bf16.mxu0 0
    %320 = vmatpush1.bf16.msra.mxu0 0
    %321 = vmatprep.subr.bf16.mxu0 0
    %322 = vmatpush1.bf16.msra.mxu0 0
    %323 = vmatprep.subr.bf16.mxu0 0
    %324 = vmatpush1.bf16.msra.mxu0 0
    %325 = vmatprep.subr.bf16.mxu0 0
    %326 = vmatpush1.bf16.msra.mxu0 0
    %327 = vmatprep.subr.bf16.mxu0 0
    %328 = vmatpush1.bf16.msra.mxu0 0
    %329 = vmatprep.subr.bf16.mxu0 0
    %330 = vmatpush1.bf16.msra.mxu0 0
    %331 = vmatprep.subr.bf16.mxu0 0
    %332 = vmatpush1.bf16.msra.mxu0 0
    %333 = vmatprep.subr.bf16.mxu0 0
    %334 = vmatpush1.bf16.msra.mxu0 0
    %335 = vmatprep.subr.bf16.mxu0 0
    %336 = vmatpush1.bf16.msra.mxu0 0
    %337 = vmatprep.subr.bf16.mxu0 0
    %338 = vmatpush1.bf16.msra.mxu0 0
    %339 = vmatprep.subr.bf16.mxu0 0
    %340 = vmatpush1.bf16.msra.mxu0 0
    %341 = vmatprep.subr.bf16.mxu0 0
    %342 = vmatpush1.bf16.msra.mxu0 0
    %343 = vmatprep.subr.bf16.mxu0 0
    %344 = vmatpush1.bf16.msra.mxu0 0
    %345 = vmatprep.mubr.bf16.mxu0 0
    %346 = vmatmul.mubr.bf16.gmra.mrb[0].mxu0 %v304
    %v347 = vpop.f32.mrb[0].mxu0
    %v348 = vadd.f32 0.0, %v347
    %v349 = vpop.f32.mrb[0].mxu0
    %v350 = vpop.f32.mrb[0].mxu0
    %v351 = vadd.f32 0.0, %v350
    %v352 = vpop.f32.mrb[0].mxu0
    %353 = vdwg.mxu0
    %354 = vst.msk [vmem:[#allocation10] sm:$0xff] %vm109, %v348
    %vm355 = vcmask 253952
    %356 = vst.msk [vmem:[#allocation10 + $0x8] sm:$0x1] %vm355, %v351
    // Predicated region
    $region46: #{single_head_attention.1} parent=1 // pred_check
      _
    $region47: #{single_head_attention.1} parent=1 // pred_check_branch
      %358 = sbr.rel (0) target = $region49
    $region48: #{single_head_attention.1} parent=1 // pred_region
      %s360 = ssub.s32 256, 256
      %361 = vsyncadd [#allocation4], %s360
      %s362 = sshll.u32 [#allocation10], 4
      %s363 = int_to_ptr.vmem [resolvable:$true] %s362
      %368 = dma.vmem_to_hbm [thread:$0]  %s363, 256, %s7, [#allocation4], 128, 128, 8
    $region49: #{single_head_attention.1} parent=1 // pred_fallthru
      _
    // Predicated region
    $region50: #{single_head_attention.1} parent=1 // pred_check
      _
    $region51: #{single_head_attention.1} parent=1 // pred_check_branch
      %370 = sbr.rel (0) target = $region53
    $region52: #{single_head_attention.1} parent=1 // pred_region
      %371 = dma.done [#allocation4], 256
    $region53: #{single_head_attention.1} parent=1 // pred_fallthru
      _
    %372 = vsyncpa [#allocation3], 1
    %373 = vsyncpa [#allocation6], 1
    %374 = vsyncpa [#allocation9], 1
    %375 = vsyncpa [#allocation4], 1

</llo_original>
